<compile_context>
chip_gen: v6e
topology: v6e:2x2x1
jax: 0.10.0
libtpu: 0.0.40
codegen_flags: <defaults>
</compile_context>

<pallas_src>
import math

import jax
import jax.numpy as jnp
from jax.experimental import pallas as pl
from jax.experimental.pallas import tpu as pltpu


def _mlp_kernel(x_ref, w1_ref, b1_ref, w2_ref, b2_ref, w3_ref, b3_ref, o_ref):
    # Layer 1: Linear (bf16 operands, f32 acc) + bias/ReLU in f32
    h1 = jnp.dot(x_ref[...], w1_ref[...], preferred_element_type=jnp.float32)
    h1 = jnp.maximum(h1 + b1_ref[...], 0.0)
    # Layer 2
    h2 = jnp.dot(h1.astype(jnp.bfloat16), w2_ref[...],
                 preferred_element_type=jnp.float32)
    h2 = jnp.maximum(h2 + b2_ref[...], 0.0)
    # Layer 3 (output padded to lane-dense width; padded lanes are tanh(0)=0)
    h3 = jnp.dot(h2.astype(jnp.bfloat16), w3_ref[...],
                 preferred_element_type=jnp.float32)
    o_ref[...] = jnp.tanh(h3 + b3_ref[...]).astype(o_ref.dtype)


def non_local_coordinator_forward(x, params, *, block_b=None):
    """Fused MLP forward.

    x:      (B, input_dim) float32
    params: dict with w1 (D_in,H), b1 (1,H), w2 (H,H), b2 (1,H),
            w3 (H,D_out), b3 (1,D_out)  -- weights already transposed, f32.
    Returns (B, D_out) float32 in [-1, 1].
    """
    B, d_in = x.shape
    H = params["w1"].shape[1]
    d_out = params["w3"].shape[1]

    # ---- batch tiling ------------------------------------------------------
    if block_b is None:
        # Keep tiles bounded so VMEM (double-buffered x/out) stays tiny even
        # on v7x's 64 MiB, and so large batches get a many-step parallel grid.
        block_b = min(1024, B)
    block_b = max(8, ((block_b + 7) // 8) * 8)      # (8,128) sublane rule
    n_blocks = pl.cdiv(B, block_b)
    b_pad = n_blocks * block_b
    if b_pad != B:
        x = jnp.pad(x, ((0, b_pad - B), (0, 0)))

    # ---- lane-dense output padding ----------------------------------------
    d_out_pad = ((d_out + 127) // 128) * 128
    w3 = params["w3"]
    b3 = params["b3"]
    if d_out_pad != d_out:
        w3 = jnp.pad(w3, ((0, 0), (0, d_out_pad - d_out)))
        b3 = jnp.pad(b3, ((0, 0), (0, d_out_pad - d_out)))

    # ---- bf16 matmul operands (f32 accumulation inside the kernel) ---------
    x_bf = x.astype(jnp.bfloat16)
    w1 = params["w1"].astype(jnp.bfloat16)
    w2 = params["w2"].astype(jnp.bfloat16)
    w3 = w3.astype(jnp.bfloat16)
    b1 = params["b1"].astype(jnp.float32)
    b2 = params["b2"].astype(jnp.float32)
    b3 = b3.astype(jnp.float32)

    grid = (n_blocks,)

    def batch_map(i):
        return (i, 0)

    def full_map(i):
        return (0, 0)

    out_padded = pl.pallas_call(
        _mlp_kernel,
        out_shape=jax.ShapeDtypeStruct((b_pad, d_out_pad), jnp.float32),
        grid=grid,
        in_specs=[
            pl.BlockSpec((block_b, d_in), batch_map),    # x tile (streamed)
            pl.BlockSpec((d_in, H), full_map),           # w1 (VMEM resident)
            pl.BlockSpec((1, H), full_map),              # b1
            pl.BlockSpec((H, H), full_map),              # w2
            pl.BlockSpec((1, H), full_map),              # b2
            pl.BlockSpec((H, d_out_pad), full_map),      # w3 (padded)
            pl.BlockSpec((1, d_out_pad), full_map),      # b3 (padded)
        ],
        out_specs=pl.BlockSpec((block_b, d_out_pad), batch_map),
        compiler_params=pltpu.CompilerParams(
            dimension_semantics=("parallel",),
        ),
    )(x_bf, w1, b1, w2, b2, w3, b3)

    return out_padded[:B, :d_out]


def init_params(key, input_dim, hidden_dim, output_dim):
    """Deterministic Kaiming-uniform init matching the PyTorch module.

    kaiming_uniform_(a=sqrt(5)) => bound = sqrt(6 / ((1 + a^2) * fan_in))
                                 = 1 / sqrt(fan_in); bias bound identical.
    Weights are stored transposed: (in_features, out_features), f32.
    """
    dims = [(input_dim, hidden_dim), (hidden_dim, hidden_dim),
            (hidden_dim, output_dim)]
    params = {}
    keys = jax.random.split(key, 2 * len(dims))
    for i, (fan_in, fan_out) in enumerate(dims):
        bound = 1.0 / math.sqrt(fan_in)
        params[f"w{i + 1}"] = jax.random.uniform(
            keys[2 * i], (fan_in, fan_out), minval=-bound, maxval=bound,
            dtype=jnp.float32)
        params[f"b{i + 1}"] = jax.random.uniform(
            keys[2 * i + 1], (1, fan_out), minval=-bound, maxval=bound,
            dtype=jnp.float32)
    return params


def _reference_forward_bf16(x, p):
    """Pure-JAX reference emulating the kernel's bf16-operand / f32-acc path."""
    xb = x.astype(jnp.bfloat16)
    w1 = p["w1"].astype(jnp.bfloat16)
    w2 = p["w2"].astype(jnp.bfloat16)
    w3 = p["w3"].astype(jnp.bfloat16)
    h1 = jnp.maximum(
        jnp.dot(xb, w1, preferred_element_type=jnp.float32) + p["b1"], 0.0)
    h2 = jnp.maximum(
        jnp.dot(h1.astype(jnp.bfloat16), w2,
                preferred_element_type=jnp.float32) + p["b2"], 0.0)
    h3 = jnp.dot(h2.astype(jnp.bfloat16), w3,
                 preferred_element_type=jnp.float32) + p["b3"]
    return jnp.tanh(h3)


def _reference_forward_f32(x, p):
    h1 = jnp.maximum(x @ p["w1"] + p["b1"], 0.0)
    h2 = jnp.maximum(h1 @ p["w2"] + p["b2"], 0.0)
    return jnp.tanh(h2 @ p["w3"] + p["b3"])


if __name__ == "__main__":
    # NOTE: at batch=8 this is overhead-bound; the kernel earns its keep at
    # large B where the tiled grid pipelines x/out DMA and shards across TCs.
    batch = 8
    input_dim = 32   # combined state of the two reservoirs
    hidden_dim = 32
    output_dim = 2   # corrective signals in [-1, 1]

    key = jax.random.PRNGKey(0)
    kx, kp = jax.random.split(key)
    x = jax.random.normal(kx, (batch, input_dim), dtype=jnp.float32)
    params = init_params(kp, input_dim, hidden_dim, output_dim)

    out = jax.block_until_ready(non_local_coordinator_forward(x, params))

    ref_bf16 = jax.block_until_ready(_reference_forward_bf16(x, params))
    ref_f32 = jax.block_until_ready(_reference_forward_f32(x, params))

    assert out.shape == (batch, output_dim)
    assert float(jnp.max(jnp.abs(out - ref_bf16))) < 2e-3   # same bf16 path
    assert float(jnp.max(jnp.abs(out - ref_f32))) < 5e-2    # vs pure-f32 math
    assert float(jnp.max(jnp.abs(out))) <= 1.0 + 1e-6       # tanh bound

    print("KERNEL_OK")
</pallas_src>

<mosaic_0001>
module attributes {stable_mosaic.version = 11 : i64} {
  func.func @_mlp_kernel(%arg0: i32, %arg1: memref<8x32xbf16, #tpu.memory_space<vmem>>, %arg2: memref<32x32xbf16, #tpu.memory_space<vmem>>, %arg3: memref<1x32xf32, #tpu.memory_space<vmem>>, %arg4: memref<32x32xbf16, #tpu.memory_space<vmem>>, %arg5: memref<1x32xf32, #tpu.memory_space<vmem>>, %arg6: memref<32x128xbf16, #tpu.memory_space<vmem>>, %arg7: memref<1x128xf32, #tpu.memory_space<vmem>>, %arg8: memref<8x128xf32, #tpu.memory_space<vmem>>) attributes {dimension_semantics = [#tpu.dimension_semantics<parallel>], iteration_bounds = array<i64: 1>, scalar_prefetch = 0 : i64, scratch_operands = 0 : i64, tpu.core_type = #tpu.core_type<tc>, window_params = [{transform_indices = @transform_0, window_bounds = array<i64: 8, 32>}, {pipeline_mode = #tpu.pipeline_mode<synchronous>, transform_indices = @transform_1, window_bounds = array<i64: 32, 32>}, {pipeline_mode = #tpu.pipeline_mode<synchronous>, transform_indices = @transform_2, window_bounds = array<i64: 1, 32>}, {pipeline_mode = #tpu.pipeline_mode<synchronous>, transform_indices = @transform_3, window_bounds = array<i64: 32, 32>}, {pipeline_mode = #tpu.pipeline_mode<synchronous>, transform_indices = @transform_4, window_bounds = array<i64: 1, 32>}, {pipeline_mode = #tpu.pipeline_mode<synchronous>, transform_indices = @transform_5, window_bounds = array<i64: 32, 128>}, {pipeline_mode = #tpu.pipeline_mode<synchronous>, transform_indices = @transform_6, window_bounds = array<i64: 1, 128>}, {transform_indices = @transform_7, window_bounds = array<i64: 8, 128>}]} {
    %c0 = arith.constant 0 : index
    %c0_0 = arith.constant 0 : index
    %0 = vector.load %arg1[%c0, %c0_0] : memref<8x32xbf16, #tpu.memory_space<vmem>>, vector<8x32xbf16>
    %c0_1 = arith.constant 0 : index
    %c0_2 = arith.constant 0 : index
    %1 = vector.load %arg2[%c0_1, %c0_2] : memref<32x32xbf16, #tpu.memory_space<vmem>>, vector<32x32xbf16>
    %cst = arith.constant dense<0.000000e+00> : vector<8x32xf32>
    %2 = tpu.matmul %0, %1, %cst {dimension_numbers = #tpu.dot_dimension_numbers<[1], [0], [0], [1], [0, 0, 1, 1], [], []>} : vector<8x32xbf16>, vector<32x32xbf16>, vector<8x32xf32> -> vector<8x32xf32>
    %c0_3 = arith.constant 0 : index
    %c0_4 = arith.constant 0 : index
    %3 = vector.load %arg3[%c0_3, %c0_4] : memref<1x32xf32, #tpu.memory_space<vmem>>, vector<1x32xf32>
    %4 = vector.broadcast %3 : vector<1x32xf32> to vector<8x32xf32>
    %5 = arith.addf %2, %4 : vector<8x32xf32>
    %cst_5 = arith.constant 0.000000e+00 : f32
    %6 = vector.broadcast %cst_5 : f32 to vector<8x32xf32>
    %7 = arith.maximumf %5, %6 : vector<8x32xf32>
    %8 = arith.truncf %7 : vector<8x32xf32> to vector<8x32xbf16>
    %c0_6 = arith.constant 0 : index
    %c0_7 = arith.constant 0 : index
    %9 = vector.load %arg4[%c0_6, %c0_7] : memref<32x32xbf16, #tpu.memory_space<vmem>>, vector<32x32xbf16>
    %cst_8 = arith.constant dense<0.000000e+00> : vector<8x32xf32>
    %10 = tpu.matmul %8, %9, %cst_8 {dimension_numbers = #tpu.dot_dimension_numbers<[1], [0], [0], [1], [0, 0, 1, 1], [], []>} : vector<8x32xbf16>, vector<32x32xbf16>, vector<8x32xf32> -> vector<8x32xf32>
    %c0_9 = arith.constant 0 : index
    %c0_10 = arith.constant 0 : index
    %11 = vector.load %arg5[%c0_9, %c0_10] : memref<1x32xf32, #tpu.memory_space<vmem>>, vector<1x32xf32>
    %12 = vector.broadcast %11 : vector<1x32xf32> to vector<8x32xf32>
    %13 = arith.addf %10, %12 : vector<8x32xf32>
    %cst_11 = arith.constant 0.000000e+00 : f32
    %14 = vector.broadcast %cst_11 : f32 to vector<8x32xf32>
    %15 = arith.maximumf %13, %14 : vector<8x32xf32>
    %16 = arith.truncf %15 : vector<8x32xf32> to vector<8x32xbf16>
    %c0_12 = arith.constant 0 : index
    %c0_13 = arith.constant 0 : index
    %17 = vector.load %arg6[%c0_12, %c0_13] : memref<32x128xbf16, #tpu.memory_space<vmem>>, vector<32x128xbf16>
    %cst_14 = arith.constant dense<0.000000e+00> : vector<8x128xf32>
    %18 = tpu.matmul %16, %17, %cst_14 {dimension_numbers = #tpu.dot_dimension_numbers<[1], [0], [0], [1], [0, 0, 1, 1], [], []>} : vector<8x32xbf16>, vector<32x128xbf16>, vector<8x128xf32> -> vector<8x128xf32>
    %c0_15 = arith.constant 0 : index
    %c0_16 = arith.constant 0 : index
    %19 = vector.load %arg7[%c0_15, %c0_16] : memref<1x128xf32, #tpu.memory_space<vmem>>, vector<1x128xf32>
    %20 = vector.broadcast %19 : vector<1x128xf32> to vector<8x128xf32>
    %21 = arith.addf %18, %20 : vector<8x128xf32>
    %22 = math.tanh %21 : vector<8x128xf32>
    %c0_17 = arith.constant 0 : index
    %c0_18 = arith.constant 0 : index
    %23 = vector.load %arg8[%c0_17, %c0_18] : memref<8x128xf32, #tpu.memory_space<vmem>>, vector<8x128xf32>
    tpu.vector_store %arg8[%c0_17, %c0_18], %22 {strides = array<i32>} : memref<8x128xf32, #tpu.memory_space<vmem>>, vector<8x128xf32>,
    return
  }
  func.func @transform_0(%arg0: i32) -> (i32, i32) {
    %c0_i32 = arith.constant 0 : i32
    %c0_i32_0 = arith.constant 0 : i32
    return %arg0, %c0_i32 : i32, i32
  }
  func.func @transform_1(%arg0: i32) -> (i32, i32) {
    %c0_i32 = arith.constant 0 : i32
    %c0_i32_0 = arith.constant 0 : i32
    %c0_i32_1 = arith.constant 0 : i32
    return %c0_i32, %c0_i32_0 : i32, i32
  }
  func.func @transform_2(%arg0: i32) -> (i32, i32) {
    %c0_i32 = arith.constant 0 : i32
    %c0_i32_0 = arith.constant 0 : i32
    %c0_i32_1 = arith.constant 0 : i32
    return %c0_i32, %c0_i32_0 : i32, i32
  }
  func.func @transform_3(%arg0: i32) -> (i32, i32) {
    %c0_i32 = arith.constant 0 : i32
    %c0_i32_0 = arith.constant 0 : i32
    %c0_i32_1 = arith.constant 0 : i32
    return %c0_i32, %c0_i32_0 : i32, i32
  }
  func.func @transform_4(%arg0: i32) -> (i32, i32) {
    %c0_i32 = arith.constant 0 : i32
    %c0_i32_0 = arith.constant 0 : i32
    %c0_i32_1 = arith.constant 0 : i32
    return %c0_i32, %c0_i32_0 : i32, i32
  }
  func.func @transform_5(%arg0: i32) -> (i32, i32) {
    %c0_i32 = arith.constant 0 : i32
    %c0_i32_0 = arith.constant 0 : i32
    %c0_i32_1 = arith.constant 0 : i32
    return %c0_i32, %c0_i32_0 : i32, i32
  }
  func.func @transform_6(%arg0: i32) -> (i32, i32) {
    %c0_i32 = arith.constant 0 : i32
    %c0_i32_0 = arith.constant 0 : i32
    %c0_i32_1 = arith.constant 0 : i32
    return %c0_i32, %c0_i32_0 : i32, i32
  }
  func.func @transform_7(%arg0: i32) -> (i32, i32) {
    %c0_i32 = arith.constant 0 : i32
    %c0_i32_0 = arith.constant 0 : i32
    return %arg0, %c0_i32 : i32, i32
  }
}

</mosaic_0001>

<llo_original>
// kernel: tpu_custom_call.1
$region0: #{tpu_custom_call.1}
  #allocation0 [shape = 'u32[]', space=smem, size = 0x4, offset = 0x4, fixed_abs, tag = 'smem constant byte address 0x4 - core index']
  #allocation1 [shape = 'u32[144,128]{1,0:T(1,128)}', space=vmem, size = 0x12000, scoped, tag = 'internal scratch']
  %s0 = inlined_call_operand.hbm [shape: bf16[8,32], index: 0, kind: input, shape index: {}]
  %s1 = inlined_call_operand.hbm [shape: bf16[32,32], index: 1, kind: input, shape index: {}]
  %s2 = inlined_call_operand.vmem [shape: f32[1,32], index: 2, kind: input, shape index: {}]
  %s3 = inlined_call_operand.hbm [shape: bf16[32,32], index: 3, kind: input, shape index: {}]
  %s4 = inlined_call_operand.vmem [shape: f32[1,32], index: 4, kind: input, shape index: {}]
  %s5 = inlined_call_operand.hbm [shape: bf16[32,128], index: 5, kind: input, shape index: {}]
  %s6 = inlined_call_operand.vmem [shape: f32[1,128], index: 6, kind: input, shape index: {}]
  %s7 = inlined_call_operand.hbm [shape: f32[8,128], index: 7, kind: output, shape index: {}]
  %s8 = sld [smem:[#allocation0]]
  $region54: #{tpu_custom_call.1} parent=0
    _
  %s10 = ssub.s32 1, %s8
  %s11 = scalar_select 0, %s10, %s8
  $region1: #{tpu_custom_call.1} parent=0
    #allocation2 [shape = 'u8[2048]{0}', space=vmem, size = 0x800, scoped, tag = 'input window, operand 0, single buffered']
    #allocation3 [shape = 's32[1]{0}', space=sflag, size = 0x4, scoped, tag = 'scoped memory for tpu_custom_call.1']
    #allocation4 [shape = 's32[1]{0}', space=sflag, size = 0x4, scoped, tag = 'scoped memory for tpu_custom_call.1']
    #allocation5 [shape = 'u8[8192]{0}', space=vmem, size = 0x2000, scoped, tag = 'input window, operand 1, single buffered']
    #allocation6 [shape = 's32[1]{0}', space=sflag, size = 0x4, scoped, tag = 'scoped memory for tpu_custom_call.1']
    #allocation7 [shape = 'u8[8192]{0}', space=vmem, size = 0x2000, scoped, tag = 'input window, operand 3, single buffered']
    #allocation8 [shape = 'u8[8192]{0}', space=vmem, size = 0x2000, scoped, tag = 'input window, operand 5, single buffered']
    #allocation9 [shape = 's32[1]{0}', space=sflag, size = 0x4, scoped, tag = 'scoped memory for tpu_custom_call.1']
    #allocation10 [shape = 'u8[4096]{0}', space=vmem, size = 0x1000, scoped, tag = 'output window, operand 0, single buffered']
    %12 = vsyncpa [#allocation3], 0
    %13 = vsyncpa [#allocation6], 0
    %14 = vsyncpa [#allocation9], 0
    %15 = vsyncpa [#allocation4], 0
    // Predicated region
    $region2: #{tpu_custom_call.1} parent=1 // pred_check
      _
    $region3: #{tpu_custom_call.1} parent=1 // pred_check_branch
      %17 = sbr.rel (0) target = $region5
    $region4: #{tpu_custom_call.1} parent=1 // pred_region
      %s19 = ssub.s32 64, 64
      %20 = vsyncadd [#allocation3], %s19
      %s22 = sshll.u32 [#allocation2], 4
      %s23 = int_to_ptr.vmem [resolvable:$true] %s22
      %25 = dma.hbm_to_vmem [thread:$0]  %s0, 64, %s23, [#allocation3]
    $region5: #{tpu_custom_call.1} parent=1 // pred_fallthru
      _
    // Predicated region
    $region6: #{tpu_custom_call.1} parent=1 // pred_check
      _
    $region7: #{tpu_custom_call.1} parent=1 // pred_check_branch
      %27 = sbr.rel (0) target = $region9
    $region8: #{tpu_custom_call.1} parent=1 // pred_region
      %s29 = ssub.s32 256, 256
      %30 = vsyncadd [#allocation6], %s29
      %s31 = sshll.u32 [#allocation5], 4
      %s32 = int_to_ptr.vmem [resolvable:$true] %s31
      %37 = dma.hbm_to_vmem [thread:$0]  %s1, 256, %s32, [#allocation6], 64, 64, 4
    $region9: #{tpu_custom_call.1} parent=1 // pred_fallthru
      _
    // Predicated region
    $region10: #{tpu_custom_call.1} parent=1 // pred_check
      _
    $region11: #{tpu_custom_call.1} parent=1 // pred_check_branch
      %39 = sbr.rel (0) target = $region13
    $region12: #{tpu_custom_call.1} parent=1 // pred_region
      _
    $region13: #{tpu_custom_call.1} parent=1 // pred_fallthru
      _
    // Predicated region
    $region14: #{tpu_custom_call.1} parent=1 // pred_check
      _
    $region15: #{tpu_custom_call.1} parent=1 // pred_check_branch
      %41 = sbr.rel (0) target = $region17
    $region16: #{tpu_custom_call.1} parent=1 // pred_region
      %s43 = ssub.s32 256, 256
      %44 = vsyncadd [#allocation6], %s43
      %s45 = sshll.u32 [#allocation7], 4
      %s46 = int_to_ptr.vmem [resolvable:$true] %s45
      %51 = dma.hbm_to_vmem [thread:$0]  %s3, 256, %s46, [#allocation6], 64, 64, 4
    $region17: #{tpu_custom_call.1} parent=1 // pred_fallthru
      _
    // Predicated region
    $region18: #{tpu_custom_call.1} parent=1 // pred_check
      _
    $region19: #{tpu_custom_call.1} parent=1 // pred_check_branch
      %53 = sbr.rel (0) target = $region21
    $region20: #{tpu_custom_call.1} parent=1 // pred_region
      _
    $region21: #{tpu_custom_call.1} parent=1 // pred_fallthru
      _
    // Predicated region
    $region22: #{tpu_custom_call.1} parent=1 // pred_check
      _
    $region23: #{tpu_custom_call.1} parent=1 // pred_check_branch
      %55 = sbr.rel (0) target = $region25
    $region24: #{tpu_custom_call.1} parent=1 // pred_region
      %s57 = ssub.s32 256, 256
      %58 = vsyncadd [#allocation9], %s57
      %s59 = sshll.u32 [#allocation8], 4
      %s60 = int_to_ptr.vmem [resolvable:$true] %s59
      %65 = dma.hbm_to_vmem [thread:$0]  %s5, 256, %s60, [#allocation9], 64, 64, 4
    $region25: #{tpu_custom_call.1} parent=1 // pred_fallthru
      _
    // Predicated region
    $region26: #{tpu_custom_call.1} parent=1 // pred_check
      _
    $region27: #{tpu_custom_call.1} parent=1 // pred_check_branch
      %67 = sbr.rel (0) target = $region29
    $region28: #{tpu_custom_call.1} parent=1 // pred_region
      _
    $region29: #{tpu_custom_call.1} parent=1 // pred_fallthru
      _
    // Predicated region
    $region30: #{tpu_custom_call.1} parent=1 // pred_check
      _
    $region31: #{tpu_custom_call.1} parent=1 // pred_check_branch
      %69 = sbr.rel (0) target = $region33
    $region32: #{tpu_custom_call.1} parent=1 // pred_region
      %70 = dma.done [#allocation3], 64
    $region33: #{tpu_custom_call.1} parent=1 // pred_fallthru
      _
    // Predicated region
    $region34: #{tpu_custom_call.1} parent=1 // pred_check
      _
    $region35: #{tpu_custom_call.1} parent=1 // pred_check_branch
      %72 = sbr.rel (0) target = $region37
    $region36: #{tpu_custom_call.1} parent=1 // pred_region
      %73 = dma.done [#allocation6], 256
    $region37: #{tpu_custom_call.1} parent=1 // pred_fallthru
      _
    // Predicated region
    $region38: #{tpu_custom_call.1} parent=1 // pred_check
      _
    $region39: #{tpu_custom_call.1} parent=1 // pred_check_branch
      %75 = sbr.rel (0) target = $region41
    $region40: #{tpu_custom_call.1} parent=1 // pred_region
      %76 = dma.done [#allocation6], 256
    $region41: #{tpu_custom_call.1} parent=1 // pred_fallthru
      _
    // Predicated region
    $region42: #{tpu_custom_call.1} parent=1 // pred_check
      _
    $region43: #{tpu_custom_call.1} parent=1 // pred_check_branch
      %78 = sbr.rel (0) target = $region45
    $region44: #{tpu_custom_call.1} parent=1 // pred_region
      %79 = dma.done [#allocation9], 256
    $region45: #{tpu_custom_call.1} parent=1 // pred_fallthru
      _
    %v81 = vld [vmem:[#allocation2] sm:$0xf]
    %v82 = vld [vmem:[#allocation5] sm:$0xf]
    %v83 = vld [vmem:[#allocation5 + $0x4] sm:$0xf]
    %v84 = vld [vmem:[#allocation5 + $0x8] sm:$0xf]
    %v85 = vld [vmem:[#allocation5 + $0xc] sm:$0xf]
    %v86 = vld [vmem:[%s2] sm:$0x1]
    %v88 = vlaneseq
    %v89 = vshrl.u32 %v88, 7
    %v90 = vsub.s32 0, %v89
    %v91 = vrot.slane %v86, %v90
    %v97 = vunpack.c.l.b16 %v82
    %v98 = vunpack.c.l.b16 %v83
    %v99 = vunpack.c.l.b16 %v84
    %v100 = vunpack.c.l.b16 %v85
    %v101 = vpack.c.b16 %v98, %v97
    %v102 = vpack.c.b16 %v100, %v99
    %vm105 = vcmask 261120
    %v107 = vsel %vm105, %v81, 0
    %109 = vmatprep.subr.bf16.mxu0 0
    %110 = vmatpush1.bf16.msra.mxu0 0
    %111 = vmatprep.subr.bf16.mxu0 0
    %112 = vmatpush1.bf16.msra.mxu0 0
    %113 = vmatprep.subr.bf16.mxu0 0
    %114 = vmatpush1.bf16.msra.mxu0 0
    %115 = vmatprep.subr.bf16.mxu0 0
    %116 = vmatpush1.bf16.msra.mxu0 0
    %117 = vmatprep.subr.bf16.mxu0 0
    %118 = vmatpush1.bf16.msra.mxu0 0
    %119 = vmatprep.subr.bf16.mxu0 0
    %120 = vmatpush1.bf16.msra.mxu0 0
    %121 = vmatprep.subr.bf16.mxu0 0
    %122 = vmatpush1.bf16.msra.mxu0 %v102
    %123 = vmatprep.subr.bf16.mxu0 0
    %124 = vmatpush1.bf16.msra.mxu0 %v101
    %125 = vmatprep.subr.bf16.mxu0 0
    %126 = vmatpush2.bf16.msra.mxu0 0
    %127 = vmatprep.subr.bf16.mxu0 0
    %128 = vmatpush2.bf16.msra.mxu0 0
    %129 = vmatprep.subr.bf16.mxu0 0
    %130 = vmatpush2.bf16.msra.mxu0 0
    %131 = vmatprep.subr.bf16.mxu0 0
    %132 = vmatpush2.bf16.msra.mxu0 0
    %133 = vmatprep.subr.bf16.mxu0 0
    %134 = vmatpush2.bf16.msra.mxu0 0
    %135 = vmatprep.subr.bf16.mxu0 0
    %136 = vmatpush2.bf16.msra.mxu0 0
    %137 = vmatprep.subr.bf16.mxu0 0
    %138 = vmatpush2.bf16.msra.mxu0 0
    %139 = vmatprep.subr.bf16.mxu0 0
    %140 = vmatpush2.bf16.msra.mxu0 0
    %141 = vmatprep.mubr.bf16.mxu0 0
    %142 = vmatmul.mubr.bf16.gmra.mxu0 %v107
    %v143 = vpop.f32.mrf.mxu0
    %v144 = vadd.f32 %v91, %v143
    %v145 = vpop.f32.mrf.mxu0
    %v146 = vpop.f32.mrf.mxu0
    %v147 = vpop.f32.mrf.mxu0
    %148 = vdwg.mxu0
    %v149 = vmax.f32 %v144, 0.0
    %v150 = vpack.c.bf16 %v149, %v149
    %v151 = vld [vmem:[#allocation7] sm:$0xf]
    %v152 = vld [vmem:[#allocation7 + $0x4] sm:$0xf]
    %v153 = vld [vmem:[#allocation7 + $0x8] sm:$0xf]
    %v154 = vld [vmem:[#allocation7 + $0xc] sm:$0xf]
    %v155 = vld [vmem:[%s4] sm:$0x1]
    %v157 = vlaneseq
    %v158 = vshrl.u32 %v157, 7
    %v159 = vsub.s32 0, %v158
    %v160 = vrot.slane %v155, %v159
    %v166 = vunpack.c.l.b16 %v151
    %v167 = vunpack.c.l.b16 %v152
    %v168 = vunpack.c.l.b16 %v153
    %v169 = vunpack.c.l.b16 %v154
    %v170 = vpack.c.b16 %v167, %v166
    %v171 = vpack.c.b16 %v169, %v168
    %v175 = vsel %vm105, %v150, 0
    %177 = vmatprep.subr.bf16.mxu0 0
    %178 = vmatpush1.bf16.msra.mxu0 0
    %179 = vmatprep.subr.bf16.mxu0 0
    %180 = vmatpush1.bf16.msra.mxu0 0
    %181 = vmatprep.subr.bf16.mxu0 0
    %182 = vmatpush1.bf16.msra.mxu0 0
    %183 = vmatprep.subr.bf16.mxu0 0
    %184 = vmatpush1.bf16.msra.mxu0 0
    %185 = vmatprep.subr.bf16.mxu0 0
    %186 = vmatpush1.bf16.msra.mxu0 0
    %187 = vmatprep.subr.bf16.mxu0 0
    %188 = vmatpush1.bf16.msra.mxu0 0
    %189 = vmatprep.subr.bf16.mxu0 0
    %190 = vmatpush1.bf16.msra.mxu0 %v171
    %191 = vmatprep.subr.bf16.mxu0 0
    %192 = vmatpush1.bf16.msra.mxu0 %v170
    %193 = vmatprep.subr.bf16.mxu0 0
    %194 = vmatpush2.bf16.msra.mxu0 0
    %195 = vmatprep.subr.bf16.mxu0 0
    %196 = vmatpush2.bf16.msra.mxu0 0
    %197 = vmatprep.subr.bf16.mxu0 0
    %198 = vmatpush2.bf16.msra.mxu0 0
    %199 = vmatprep.subr.bf16.mxu0 0
    %200 = vmatpush2.bf16.msra.mxu0 0
    %201 = vmatprep.subr.bf16.mxu0 0
    %202 = vmatpush2.bf16.msra.mxu0 0
    %203 = vmatprep.subr.bf16.mxu0 0
    %204 = vmatpush2.bf16.msra.mxu0 0
    %205 = vmatprep.subr.bf16.mxu0 0
    %206 = vmatpush2.bf16.msra.mxu0 0
    %207 = vmatprep.subr.bf16.mxu0 0
    %208 = vmatpush2.bf16.msra.mxu0 0
    %209 = vmatprep.mubr.bf16.mxu0 0
    %210 = vmatmul.mubr.bf16.gmra.mxu0 %v175
    %v211 = vpop.f32.mrf.mxu0
    %v212 = vadd.f32 %v160, %v211
    %v213 = vpop.f32.mrf.mxu0
    %v214 = vpop.f32.mrf.mxu0
    %v215 = vpop.f32.mrf.mxu0
    %216 = vdwg.mxu0
    %v217 = vmax.f32 %v212, 0.0
    %v218 = vpack.c.bf16 %v217, %v217
    %v219 = vld [vmem:[#allocation8] sm:$0xf]
    %v220 = vld [vmem:[#allocation8 + $0x4] sm:$0xf]
    %v221 = vld [vmem:[#allocation8 + $0x8] sm:$0xf]
    %v222 = vld [vmem:[#allocation8 + $0xc] sm:$0xf]
    %v223 = vld [vmem:[%s6] sm:$0x1]
    %v225 = vlaneseq
    %v226 = vshrl.u32 %v225, 7
    %v227 = vsub.s32 0, %v226
    %v228 = vrot.slane %v223, %v227
    %v234 = vunpack.c.l.b16 %v219
    %v235 = vunpack.c.l.b16 %v220
    %v236 = vunpack.c.l.b16 %v221
    %v237 = vunpack.c.l.b16 %v222
    %v238 = vpack.c.b16 %v235, %v234
    %v239 = vpack.c.b16 %v237, %v236
    %v243 = vsel %vm105, %v218, 0
    %245 = vmatprep.subr.bf16.mxu0 0
    %246 = vmatpush1.bf16.msra.mxu0 0
    %247 = vmatprep.subr.bf16.mxu0 0
    %248 = vmatpush1.bf16.msra.mxu0 0
    %249 = vmatprep.subr.bf16.mxu0 0
    %250 = vmatpush1.bf16.msra.mxu0 0
    %251 = vmatprep.subr.bf16.mxu0 0
    %252 = vmatpush1.bf16.msra.mxu0 0
    %253 = vmatprep.subr.bf16.mxu0 0
    %254 = vmatpush1.bf16.msra.mxu0 0
    %255 = vmatprep.subr.bf16.mxu0 0
    %256 = vmatpush1.bf16.msra.mxu0 0
    %257 = vmatprep.subr.bf16.mxu0 0
    %258 = vmatpush1.bf16.msra.mxu0 %v239
    %259 = vmatprep.subr.bf16.mxu0 0
    %260 = vmatpush1.bf16.msra.mxu0 %v238
    %261 = vmatprep.subr.bf16.mxu0 0
    %262 = vmatpush2.bf16.msra.mxu0 0
    %263 = vmatprep.subr.bf16.mxu0 0
    %264 = vmatpush2.bf16.msra.mxu0 0
    %265 = vmatprep.subr.bf16.mxu0 0
    %266 = vmatpush2.bf16.msra.mxu0 0
    %267 = vmatprep.subr.bf16.mxu0 0
    %268 = vmatpush2.bf16.msra.mxu0 0
    %269 = vmatprep.subr.bf16.mxu0 0
    %270 = vmatpush2.bf16.msra.mxu0 0
    %271 = vmatprep.subr.bf16.mxu0 0
    %272 = vmatpush2.bf16.msra.mxu0 0
    %273 = vmatprep.subr.bf16.mxu0 0
    %274 = vmatpush2.bf16.msra.mxu0 0
    %275 = vmatprep.subr.bf16.mxu0 0
    %276 = vmatpush2.bf16.msra.mxu0 0
    %277 = vmatprep.mubr.bf16.mxu0 0
    %278 = vmatmul.mubr.bf16.gmra.mxu0 %v243
    %v279 = vpop.f32.mrf.mxu0
    %v280 = vadd.f32 %v228, %v279
    %v281 = vpop.f32.mrf.mxu0
    %v282 = vpop.f32.mrf.mxu0
    %v283 = vpop.f32.mrf.mxu0
    %284 = vdwg.mxu0
    %v285 = vtanh.pop %v280
    %286 = vst [vmem:[#allocation10] sm:$0xff] %v285
    // Predicated region
    $region46: #{tpu_custom_call.1} parent=1 // pred_check
      _
    $region47: #{tpu_custom_call.1} parent=1 // pred_check_branch
      %288 = sbr.rel (0) target = $region49
    $region48: #{tpu_custom_call.1} parent=1 // pred_region
      %s290 = ssub.s32 128, 128
      %291 = vsyncadd [#allocation4], %s290
      %s293 = sshll.u32 [#allocation10], 4
      %s294 = int_to_ptr.vmem [resolvable:$true] %s293
      %296 = dma.vmem_to_hbm [thread:$0]  %s294, 128, %s7, [#allocation4]
    $region49: #{tpu_custom_call.1} parent=1 // pred_fallthru
      _
    // Predicated region
    $region50: #{tpu_custom_call.1} parent=1 // pred_check
      _
    $region51: #{tpu_custom_call.1} parent=1 // pred_check_branch
      %298 = sbr.rel (0) target = $region53
    $region52: #{tpu_custom_call.1} parent=1 // pred_region
      %299 = dma.done [#allocation4], 128
    $region53: #{tpu_custom_call.1} parent=1 // pred_fallthru
      _
    %300 = vsyncpa [#allocation3], 1
    %301 = vsyncpa [#allocation6], 1
    %302 = vsyncpa [#allocation9], 1
    %303 = vsyncpa [#allocation4], 1

</llo_original>
